<compile_context>
chip_gen: v7x
topology: tpu7x:2x2x1
jax: 0.10.0
libtpu: 0.0.40
codegen_flags: <defaults>
</compile_context>

<pallas_src>
import functools

import jax
import jax.numpy as jnp
from jax.experimental import pallas as pl
from jax.experimental.pallas import tpu as pltpu


def actor_kernel(x_ref, w1_ref, b1_ref, w2_ref, b2_ref, w3_ref, b3_ref, o_ref):
    cdt = w1_ref.dtype  # compute dtype of the matmul operands (f32 or bf16)

    # layer1 + ReLU (accumulate in f32 on the MXU)
    h1 = jnp.dot(x_ref[...], w1_ref[...], preferred_element_type=jnp.float32)
    h1 = jnp.maximum(h1 + b1_ref[...], 0.0).astype(cdt)

    # layer2 + ReLU
    h2 = jnp.dot(h1, w2_ref[...], preferred_element_type=jnp.float32)
    h2 = jnp.maximum(h2 + b2_ref[...], 0.0).astype(cdt)

    # layer3 + softmax(-1); exact division so each row sums to 1 (f32 precision).
    logits = jnp.dot(h2, w3_ref[...], preferred_element_type=jnp.float32) + b3_ref[...]
    m = jnp.max(logits, axis=-1, keepdims=True)
    e = jnp.exp(logits - m)
    denom = jnp.sum(e, axis=-1, keepdims=True)
    o_ref[...] = (e / denom).astype(o_ref.dtype)


def _round_up(v, m):
    return -(-v // m) * m


@functools.partial(jax.jit, static_argnames=("block_b", "compute_dtype"))
def actor_forward(x, w1, b1, w2, b2, w3, b3, *, block_b=1024,
                  compute_dtype=jnp.float32):
    """Batched ActorNetwork forward. x: (B, in), W: (in, out), b: (1, out)."""
    B, in_dim = x.shape
    fc1 = w1.shape[1]
    fc2 = w2.shape[1]
    out_dim = w3.shape[1]

    # Optional bf16 streaming of x / weights (accumulation stays f32 in-kernel).
    xc = x.astype(compute_dtype)
    w1c = w1.astype(compute_dtype)
    w2c = w2.astype(compute_dtype)
    w3c = w3.astype(compute_dtype)
    b1c = b1.astype(jnp.float32)
    b2c = b2.astype(jnp.float32)
    b3c = b3.astype(jnp.float32)

    # ---- batch tile: multiple of 8, <= block_b, and >= 2 grid steps when the
    # batch allows it (so v7x megacore has work for both TensorCores). ----
    tb = max(8, min(_round_up(block_b, 8), _round_up(B, 8)))
    if B > 8:
        tb = min(tb, _round_up(pl.cdiv(B, 2), 8))
    b_pad = _round_up(B, tb)
    xp = xc if b_pad == B else jnp.zeros((b_pad, in_dim), xc.dtype).at[:B].set(xc)

    grid = (b_pad // tb,)

    itemsize = jnp.dtype(compute_dtype).itemsize
    flops = 2 * b_pad * (in_dim * fc1 + fc1 * fc2 + fc2 * out_dim)
    bytes_accessed = (
        b_pad * in_dim * itemsize                                  # x
        + (in_dim * fc1 + fc1 * fc2 + fc2 * out_dim) * itemsize    # weights
        + (fc1 + fc2 + out_dim) * 4                                # biases (f32)
        + b_pad * out_dim * 4                                      # output (f32)
    )

    # VMEM budget from the real working set (double-buffered streamed tiles +
    # resident weights + generous headroom), capped well below physical VMEM.
    tile_bytes = 2 * (tb * in_dim * itemsize + tb * out_dim * 4)
    weight_bytes = (in_dim * fc1 + fc1 * fc2 + fc2 * out_dim) * itemsize \
        + (fc1 + fc2 + out_dim) * 4
    vmem_limit = int(min(32 << 20, max(8 << 20, 8 * (tile_bytes + weight_bytes))))

    out = pl.pallas_call(
        actor_kernel,
        out_shape=jax.ShapeDtypeStruct((b_pad, out_dim), jnp.float32),
        grid=grid,
        in_specs=[
            pl.BlockSpec((tb, in_dim), lambda i: (i, 0)),    # x: tiled over batch
            pl.BlockSpec((in_dim, fc1), lambda i: (0, 0)),   # weights/biases: resident
            pl.BlockSpec((1, fc1), lambda i: (0, 0)),
            pl.BlockSpec((fc1, fc2), lambda i: (0, 0)),
            pl.BlockSpec((1, fc2), lambda i: (0, 0)),
            pl.BlockSpec((fc2, out_dim), lambda i: (0, 0)),  # out_dim == full extent
            pl.BlockSpec((1, out_dim), lambda i: (0, 0)),
        ],
        out_specs=pl.BlockSpec((tb, out_dim), lambda i: (i, 0)),
        compiler_params=pltpu.CompilerParams(
            dimension_semantics=("parallel",),  # shard batch tiles across TCs (v7x)
            vmem_limit_bytes=vmem_limit,
        ),
        cost_estimate=pl.CostEstimate(
            flops=flops,
            transcendentals=b_pad * out_dim,    # exp in softmax
            bytes_accessed=bytes_accessed,
        ),
    )(xp, w1c, b1c, w2c, b2c, w3c, b3c)

    return out if b_pad == B else out[:B]


def init_linear(key, fan_in, fan_out):
    # Mimic PyTorch nn.Linear default init: U(-1/sqrt(fan_in), +1/sqrt(fan_in)).
    kw, kb = jax.random.split(key)
    bound = 1.0 / jnp.sqrt(jnp.float32(fan_in))
    w = jax.random.uniform(kw, (fan_in, fan_out), jnp.float32, -bound, bound)
    b = jax.random.uniform(kb, (1, fan_out), jnp.float32, -bound, bound)
    return w, b


if __name__ == "__main__":
    # ActorNetwork(fc1=64, fc2=64, input=32, output=8); batch chosen non-multiple
    # of the tile so both the batch-padding and multi-step-grid paths run.
    batch, in_dim, fc1, fc2, out_dim = 200, 32, 64, 64, 8

    key = jax.random.PRNGKey(0)
    k_x, k1, k2, k3 = jax.random.split(key, 4)

    x = jax.random.normal(k_x, (batch, in_dim), jnp.float32)
    w1, b1 = init_linear(k1, in_dim, fc1)
    w2, b2 = init_linear(k2, fc1, fc2)
    w3, b3 = init_linear(k3, fc2, out_dim)

    # Pure-JAX reference.
    h1 = jnp.maximum(x @ w1 + b1, 0.0)
    h2 = jnp.maximum(h1 @ w2 + b2, 0.0)
    ref = jax.nn.softmax(h2 @ w3 + b3, axis=-1)

    # f32 path: exact softmax, tight tolerance.
    out = actor_forward(x, w1, b1, w2, b2, w3, b3)
    out = jax.block_until_ready(out)
    assert out.shape == (batch, out_dim)
    assert jnp.allclose(out, ref, atol=1e-5, rtol=1e-5)
    assert jnp.allclose(jnp.sum(out, axis=-1), 1.0, atol=1e-5)

    # bf16 fast path (optional perf mode): looser value tolerance, but rows still
    # sum to 1 because the softmax division stays in f32.
    out_bf16 = actor_forward(x, w1, b1, w2, b2, w3, b3,
                             compute_dtype=jnp.bfloat16)
    out_bf16 = jax.block_until_ready(out_bf16)
    assert out_bf16.shape == (batch, out_dim)
    assert jnp.allclose(out_bf16, ref, atol=5e-2, rtol=5e-2)
    assert jnp.allclose(jnp.sum(out_bf16, axis=-1), 1.0, atol=1e-3)

    print("KERNEL_OK")
</pallas_src>

<mosaic_0001>
module attributes {stable_mosaic.version = 11 : i64} {
  func.func @actor_kernel(%arg0: i32, %arg1: memref<104x32xf32, #tpu.memory_space<vmem>>, %arg2: memref<32x64xf32, #tpu.memory_space<vmem>>, %arg3: memref<1x64xf32, #tpu.memory_space<vmem>>, %arg4: memref<64x64xf32, #tpu.memory_space<vmem>>, %arg5: memref<1x64xf32, #tpu.memory_space<vmem>>, %arg6: memref<64x8xf32, #tpu.memory_space<vmem>>, %arg7: memref<1x8xf32, #tpu.memory_space<vmem>>, %arg8: memref<104x8xf32, #tpu.memory_space<vmem>>) attributes {dimension_semantics = [#tpu.dimension_semantics<parallel>], iteration_bounds = array<i64: 2>, scalar_prefetch = 0 : i64, scratch_operands = 0 : i64, tpu.core_type = #tpu.core_type<tc>, window_params = [{transform_indices = @transform_0, window_bounds = array<i64: 104, 32>}, {pipeline_mode = #tpu.pipeline_mode<synchronous>, transform_indices = @transform_1, window_bounds = array<i64: 32, 64>}, {pipeline_mode = #tpu.pipeline_mode<synchronous>, transform_indices = @transform_2, window_bounds = array<i64: 1, 64>}, {pipeline_mode = #tpu.pipeline_mode<synchronous>, transform_indices = @transform_3, window_bounds = array<i64: 64, 64>}, {pipeline_mode = #tpu.pipeline_mode<synchronous>, transform_indices = @transform_4, window_bounds = array<i64: 1, 64>}, {pipeline_mode = #tpu.pipeline_mode<synchronous>, transform_indices = @transform_5, window_bounds = array<i64: 64, 8>}, {pipeline_mode = #tpu.pipeline_mode<synchronous>, transform_indices = @transform_6, window_bounds = array<i64: 1, 8>}, {transform_indices = @transform_7, window_bounds = array<i64: 104, 8>}]} {
    %c0 = arith.constant 0 : index
    %c0_0 = arith.constant 0 : index
    %0 = vector.load %arg1[%c0, %c0_0] : memref<104x32xf32, #tpu.memory_space<vmem>>, vector<104x32xf32>
    %c0_1 = arith.constant 0 : index
    %c0_2 = arith.constant 0 : index
    %1 = vector.load %arg2[%c0_1, %c0_2] : memref<32x64xf32, #tpu.memory_space<vmem>>, vector<32x64xf32>
    %cst = arith.constant dense<0.000000e+00> : vector<104x64xf32>
    %2 = tpu.matmul %0, %1, %cst {dimension_numbers = #tpu.dot_dimension_numbers<[1], [0], [0], [1], [0, 0, 1, 1], [], []>} : vector<104x32xf32>, vector<32x64xf32>, vector<104x64xf32> -> vector<104x64xf32>
    %c0_3 = arith.constant 0 : index
    %c0_4 = arith.constant 0 : index
    %3 = vector.load %arg3[%c0_3, %c0_4] : memref<1x64xf32, #tpu.memory_space<vmem>>, vector<1x64xf32>
    %4 = vector.broadcast %3 : vector<1x64xf32> to vector<104x64xf32>
    %5 = arith.addf %2, %4 : vector<104x64xf32>
    %cst_5 = arith.constant 0.000000e+00 : f32
    %6 = vector.broadcast %cst_5 : f32 to vector<104x64xf32>
    %7 = arith.maximumf %5, %6 : vector<104x64xf32>
    %c0_6 = arith.constant 0 : index
    %c0_7 = arith.constant 0 : index
    %8 = vector.load %arg4[%c0_6, %c0_7] : memref<64x64xf32, #tpu.memory_space<vmem>>, vector<64x64xf32>
    %cst_8 = arith.constant dense<0.000000e+00> : vector<104x64xf32>
    %9 = tpu.matmul %7, %8, %cst_8 {dimension_numbers = #tpu.dot_dimension_numbers<[1], [0], [0], [1], [0, 0, 1, 1], [], []>} : vector<104x64xf32>, vector<64x64xf32>, vector<104x64xf32> -> vector<104x64xf32>
    %c0_9 = arith.constant 0 : index
    %c0_10 = arith.constant 0 : index
    %10 = vector.load %arg5[%c0_9, %c0_10] : memref<1x64xf32, #tpu.memory_space<vmem>>, vector<1x64xf32>
    %11 = vector.broadcast %10 : vector<1x64xf32> to vector<104x64xf32>
    %12 = arith.addf %9, %11 : vector<104x64xf32>
    %cst_11 = arith.constant 0.000000e+00 : f32
    %13 = vector.broadcast %cst_11 : f32 to vector<104x64xf32>
    %14 = arith.maximumf %12, %13 : vector<104x64xf32>
    %c0_12 = arith.constant 0 : index
    %c0_13 = arith.constant 0 : index
    %15 = vector.load %arg6[%c0_12, %c0_13] : memref<64x8xf32, #tpu.memory_space<vmem>>, vector<64x8xf32>
    %cst_14 = arith.constant dense<0.000000e+00> : vector<104x8xf32>
    %16 = tpu.matmul %14, %15, %cst_14 {dimension_numbers = #tpu.dot_dimension_numbers<[1], [0], [0], [1], [0, 0, 1, 1], [], []>} : vector<104x64xf32>, vector<64x8xf32>, vector<104x8xf32> -> vector<104x8xf32>
    %c0_15 = arith.constant 0 : index
    %c0_16 = arith.constant 0 : index
    %17 = vector.load %arg7[%c0_15, %c0_16] : memref<1x8xf32, #tpu.memory_space<vmem>>, vector<1x8xf32>
    %18 = vector.broadcast %17 : vector<1x8xf32> to vector<104x8xf32>
    %19 = arith.addf %16, %18 : vector<104x8xf32>
    %cst_17 = arith.constant dense<0xFF800000> : vector<104xf32>
    %20 = vector.multi_reduction <maximumf>, %19, %cst_17 [1] : vector<104x8xf32> to vector<104xf32>
    %21 = vector.shape_cast %20 : vector<104xf32> to vector<104x1xf32>
    %22 = vector.broadcast %21 : vector<104x1xf32> to vector<104x8xf32>
    %23 = arith.subf %19, %22 : vector<104x8xf32>
    %24 = math.exp %23 : vector<104x8xf32>
    %cst_18 = arith.constant dense<0.000000e+00> : vector<104xf32>
    %25 = vector.multi_reduction <add>, %24, %cst_18 [1] : vector<104x8xf32> to vector<104xf32>
    %26 = vector.shape_cast %25 : vector<104xf32> to vector<104x1xf32>
    %27 = vector.broadcast %26 : vector<104x1xf32> to vector<104x8xf32>
    %28 = arith.divf %24, %27 : vector<104x8xf32>
    %c0_19 = arith.constant 0 : index
    %c0_20 = arith.constant 0 : index
    %29 = vector.load %arg8[%c0_19, %c0_20] : memref<104x8xf32, #tpu.memory_space<vmem>>, vector<104x8xf32>
    tpu.vector_store %arg8[%c0_19, %c0_20], %28 {strides = array<i32>} : memref<104x8xf32, #tpu.memory_space<vmem>>, vector<104x8xf32>,
    return
  }
  func.func @transform_0(%arg0: i32) -> (i32, i32) {
    %c0_i32 = arith.constant 0 : i32
    %c0_i32_0 = arith.constant 0 : i32
    return %arg0, %c0_i32 : i32, i32
  }
  func.func @transform_1(%arg0: i32) -> (i32, i32) {
    %c0_i32 = arith.constant 0 : i32
    %c0_i32_0 = arith.constant 0 : i32
    %c0_i32_1 = arith.constant 0 : i32
    return %c0_i32, %c0_i32_0 : i32, i32
  }
  func.func @transform_2(%arg0: i32) -> (i32, i32) {
    %c0_i32 = arith.constant 0 : i32
    %c0_i32_0 = arith.constant 0 : i32
    %c0_i32_1 = arith.constant 0 : i32
    return %c0_i32, %c0_i32_0 : i32, i32
  }
  func.func @transform_3(%arg0: i32) -> (i32, i32) {
    %c0_i32 = arith.constant 0 : i32
    %c0_i32_0 = arith.constant 0 : i32
    %c0_i32_1 = arith.constant 0 : i32
    return %c0_i32, %c0_i32_0 : i32, i32
  }
  func.func @transform_4(%arg0: i32) -> (i32, i32) {
    %c0_i32 = arith.constant 0 : i32
    %c0_i32_0 = arith.constant 0 : i32
    %c0_i32_1 = arith.constant 0 : i32
    return %c0_i32, %c0_i32_0 : i32, i32
  }
  func.func @transform_5(%arg0: i32) -> (i32, i32) {
    %c0_i32 = arith.constant 0 : i32
    %c0_i32_0 = arith.constant 0 : i32
    %c0_i32_1 = arith.constant 0 : i32
    return %c0_i32, %c0_i32_0 : i32, i32
  }
  func.func @transform_6(%arg0: i32) -> (i32, i32) {
    %c0_i32 = arith.constant 0 : i32
    %c0_i32_0 = arith.constant 0 : i32
    %c0_i32_1 = arith.constant 0 : i32
    return %c0_i32, %c0_i32_0 : i32, i32
  }
  func.func @transform_7(%arg0: i32) -> (i32, i32) {
    %c0_i32 = arith.constant 0 : i32
    %c0_i32_0 = arith.constant 0 : i32
    return %arg0, %c0_i32 : i32, i32
  }
}

</mosaic_0001>

<llo_original>
// kernel: actor_forward.1
$region0: #{actor_forward.1}
  #allocation0 [shape = 'u32[]', space=smem, size = 0x4, offset = 0x4, fixed_abs, tag = 'smem constant byte address 0x4 - core index']
  #allocation1 [shape = 'u32[144,128]{1,0:T(1,128)}', space=vmem, size = 0x12000, scoped, tag = 'internal scratch']
  %s0 = inlined_call_operand.vmem [shape: f32[208,32], index: 0, kind: input, shape index: {}]
  %s1 = inlined_call_operand.vmem [shape: f32[32,64], index: 1, kind: input, shape index: {}]
  %s2 = inlined_call_operand.vmem [shape: f32[1,64], index: 2, kind: input, shape index: {}]
  %s3 = inlined_call_operand.vmem [shape: f32[64,64], index: 3, kind: input, shape index: {}]
  %s4 = inlined_call_operand.vmem [shape: f32[1,64], index: 4, kind: input, shape index: {}]
  %s5 = inlined_call_operand.vmem [shape: f32[64,8], index: 5, kind: input, shape index: {}]
  %s6 = inlined_call_operand.vmem [shape: f32[1,8], index: 6, kind: input, shape index: {}]
  %s7 = inlined_call_operand.vmem [shape: f32[208,8], index: 7, kind: output, shape index: {}]
  %s8 = sld [smem:[#allocation0]]
  $region61: #{actor_forward.1} parent=0
    _
  %s10 = ssub.s32 1, %s8
  %s11 = scalar_select 0, %s10, %s8
  loop: start=0, step=1, limit=4
  $region2: #{actor_forward.1} parent=0 // loop_pre_header
    _
  $region3: #{actor_forward.1} parent=0 // loop_header
    %s13 = sphi 0, %s17
    %p14 = scmp.ge.s32.totalorder %s13, 4
    %s23 = sphi 0, %s25
    %s26 = sphi 0, %s23
    %s27 = sphi 0, %s26
    %s43 = sphi 0, %s27
    %s47 = sphi 0, %s47
    %s49 = sphi 0, %s47
    %s50 = sphi 0, %s49
    %s64 = sphi 0, %s50
    %s68 = sphi 0, %s68
    %s70 = sphi 0, %s68
    %s71 = sphi 0, %s70
    %s85 = sphi 0, %s71
    %s89 = sphi 0, %s89
    %s91 = sphi 0, %s89
    %s92 = sphi 0, %s91
    %s106 = sphi 0, %s92
    %s110 = sphi 0, %s110
    %s112 = sphi 0, %s110
    %s113 = sphi 0, %s112
    %s127 = sphi 0, %s113
    %s131 = sphi 0, %s131
    %s133 = sphi 0, %s131
    %s134 = sphi 0, %s133
    %s148 = sphi 0, %s134
    %s152 = sphi 0, %s152
    %s154 = sphi 0, %s152
    %s155 = sphi 0, %s154
    %s169 = sphi 0, %s155
    %s175 = sphi 0, %s177
    %s178 = sphi 0, %s175
    %s179 = sphi 0, %s178
    %s195 = sphi 0, %s179
  $region4: #{actor_forward.1} parent=0 // loop_header_branch
    %16 = sbr.rel (%p14) target = $region8
  $region5: #{actor_forward.1} parent=0 // loop_body
    %s18 = ssub.s32 %s13, 1
    %s19 = ssub.s32 %s13, 2
    %s20 = sadd.s32 %s13, 1
    %s21 = ssub.s32 %s13, %s20
    %p22 = scmp.eq.s32.totalorder %s21, 0
    %s24 = sadd.s32 %s23, 1
    %s25 = scalar_select %p22, %s23, %s24
    %p28 = pneg %p22
    %p29 = scmp.eq.s32.totalorder %s13, 1
    %p30 = por %p28, %p29
    %p31 = scmp.ne.s32.totalorder %s23, %s26
    %p32 = scmp.eq.s32.totalorder %s13, 0
    %p33 = por %p31, %p32
    %p34 = scmp.ne.s32.totalorder %s23, %s26
    %p35 = scmp.eq.s32.totalorder %s18, 1
    %p36 = por %p34, %p35
    %p37 = scmp.ne.s32.totalorder %s26, %s27
    %p38 = scmp.eq.s32.totalorder %s18, 0
    %p39 = por %p37, %p38
    %p40 = scmp.ne.s32.totalorder %s26, %s27
    %p41 = scmp.eq.s32.totalorder %s19, 1
    %p42 = por %p40, %p41
    %p44 = scmp.ne.s32.totalorder %s27, %s43
    %p45 = scmp.eq.s32.totalorder %s19, 0
    %p46 = por %p44, %p45
    %s48 = sadd.s32 %s47, 1
    %p51 = scmp.eq.s32.totalorder %s13, 1
    %p52 = scmp.ne.s32.totalorder %s47, %s49
    %p53 = scmp.eq.s32.totalorder %s13, 0
    %p54 = por %p52, %p53
    %p55 = scmp.ne.s32.totalorder %s47, %s49
    %p56 = scmp.eq.s32.totalorder %s18, 1
    %p57 = por %p55, %p56
    %p58 = scmp.ne.s32.totalorder %s49, %s50
    %p59 = scmp.eq.s32.totalorder %s18, 0
    %p60 = por %p58, %p59
    %p61 = scmp.ne.s32.totalorder %s49, %s50
    %p62 = scmp.eq.s32.totalorder %s19, 1
    %p63 = por %p61, %p62
    %p65 = scmp.ne.s32.totalorder %s50, %s64
    %p66 = scmp.eq.s32.totalorder %s19, 0
    %p67 = por %p65, %p66
    %s69 = sadd.s32 %s68, 1
    %p72 = scmp.eq.s32.totalorder %s13, 1
    %p73 = scmp.ne.s32.totalorder %s68, %s70
    %p74 = scmp.eq.s32.totalorder %s13, 0
    %p75 = por %p73, %p74
    %p76 = scmp.ne.s32.totalorder %s68, %s70
    %p77 = scmp.eq.s32.totalorder %s18, 1
    %p78 = por %p76, %p77
    %p79 = scmp.ne.s32.totalorder %s70, %s71
    %p80 = scmp.eq.s32.totalorder %s18, 0
    %p81 = por %p79, %p80
    %p82 = scmp.ne.s32.totalorder %s70, %s71
    %p83 = scmp.eq.s32.totalorder %s19, 1
    %p84 = por %p82, %p83
    %p86 = scmp.ne.s32.totalorder %s71, %s85
    %p87 = scmp.eq.s32.totalorder %s19, 0
    %p88 = por %p86, %p87
    %s90 = sadd.s32 %s89, 1
    %p93 = scmp.eq.s32.totalorder %s13, 1
    %p94 = scmp.ne.s32.totalorder %s89, %s91
    %p95 = scmp.eq.s32.totalorder %s13, 0
    %p96 = por %p94, %p95
    %p97 = scmp.ne.s32.totalorder %s89, %s91
    %p98 = scmp.eq.s32.totalorder %s18, 1
    %p99 = por %p97, %p98
    %p100 = scmp.ne.s32.totalorder %s91, %s92
    %p101 = scmp.eq.s32.totalorder %s18, 0
    %p102 = por %p100, %p101
    %p103 = scmp.ne.s32.totalorder %s91, %s92
    %p104 = scmp.eq.s32.totalorder %s19, 1
    %p105 = por %p103, %p104
    %p107 = scmp.ne.s32.totalorder %s92, %s106
    %p108 = scmp.eq.s32.totalorder %s19, 0
    %p109 = por %p107, %p108
    %s111 = sadd.s32 %s110, 1
    %p114 = scmp.eq.s32.totalorder %s13, 1
    %p115 = scmp.ne.s32.totalorder %s110, %s112
    %p116 = scmp.eq.s32.totalorder %s13, 0
    %p117 = por %p115, %p116
    %p118 = scmp.ne.s32.totalorder %s110, %s112
    %p119 = scmp.eq.s32.totalorder %s18, 1
    %p120 = por %p118, %p119
    %p121 = scmp.ne.s32.totalorder %s112, %s113
    %p122 = scmp.eq.s32.totalorder %s18, 0
    %p123 = por %p121, %p122
    %p124 = scmp.ne.s32.totalorder %s112, %s113
    %p125 = scmp.eq.s32.totalorder %s19, 1
    %p126 = por %p124, %p125
    %p128 = scmp.ne.s32.totalorder %s113, %s127
    %p129 = scmp.eq.s32.totalorder %s19, 0
    %p130 = por %p128, %p129
    %s132 = sadd.s32 %s131, 1
    %p135 = scmp.eq.s32.totalorder %s13, 1
    %p136 = scmp.ne.s32.totalorder %s131, %s133
    %p137 = scmp.eq.s32.totalorder %s13, 0
    %p138 = por %p136, %p137
    %p139 = scmp.ne.s32.totalorder %s131, %s133
    %p140 = scmp.eq.s32.totalorder %s18, 1
    %p141 = por %p139, %p140
    %p142 = scmp.ne.s32.totalorder %s133, %s134
    %p143 = scmp.eq.s32.totalorder %s18, 0
    %p144 = por %p142, %p143
    %p145 = scmp.ne.s32.totalorder %s133, %s134
    %p146 = scmp.eq.s32.totalorder %s19, 1
    %p147 = por %p145, %p146
    %p149 = scmp.ne.s32.totalorder %s134, %s148
    %p150 = scmp.eq.s32.totalorder %s19, 0
    %p151 = por %p149, %p150
    %s153 = sadd.s32 %s152, 1
    %p156 = scmp.eq.s32.totalorder %s13, 1
    %p157 = scmp.ne.s32.totalorder %s152, %s154
    %p158 = scmp.eq.s32.totalorder %s13, 0
    %p159 = por %p157, %p158
    %p160 = scmp.ne.s32.totalorder %s152, %s154
    %p161 = scmp.eq.s32.totalorder %s18, 1
    %p162 = por %p160, %p161
    %p163 = scmp.ne.s32.totalorder %s154, %s155
    %p164 = scmp.eq.s32.totalorder %s18, 0
    %p165 = por %p163, %p164
    %p166 = scmp.ne.s32.totalorder %s154, %s155
    %p167 = scmp.eq.s32.totalorder %s19, 1
    %p168 = por %p166, %p167
    %p170 = scmp.ne.s32.totalorder %s155, %s169
    %p171 = scmp.eq.s32.totalorder %s19, 0
    %p172 = por %p170, %p171
    %s173 = ssub.s32 %s13, %s20
    %p174 = scmp.eq.s32.totalorder %s173, 0
    %s176 = sadd.s32 %s175, 1
    %s177 = scalar_select %p174, %s175, %s176
    %p180 = pneg %p174
    %p181 = scmp.eq.s32.totalorder %s13, 1
    %p182 = por %p180, %p181
    %p183 = scmp.ne.s32.totalorder %s175, %s178
    %p184 = scmp.eq.s32.totalorder %s13, 0
    %p185 = por %p183, %p184
    %p186 = scmp.ne.s32.totalorder %s175, %s178
    %p187 = scmp.eq.s32.totalorder %s18, 1
    %p188 = por %p186, %p187
    %p189 = scmp.ne.s32.totalorder %s178, %s179
    %p190 = scmp.eq.s32.totalorder %s18, 0
    %p191 = por %p189, %p190
    %p192 = scmp.ne.s32.totalorder %s178, %s179
    %p193 = scmp.eq.s32.totalorder %s19, 1
    %p194 = por %p192, %p193
    %p196 = scmp.ne.s32.totalorder %s179, %s195
    %p197 = scmp.eq.s32.totalorder %s19, 0
    %p198 = por %p196, %p197
    %p199 = scmp.le.s32.totalorder 1, %s13
    %p200 = scmp.lt.s32.totalorder %s13, 3
    %p201 = pnand %p199, %p200
    %p202 = pneg %p201
    // Predicated region
    $region9: #{actor_forward.1} parent=5 // pred_check
      _
    $region10: #{actor_forward.1} parent=5 // pred_check_branch
      %204 = sbr.rel (%p201) target = $region12
    $region11: #{actor_forward.1} parent=5 // pred_region
      %s205 = ssub.s32 %s13, 1
      // Predicated region
      $region13: #{actor_forward.1} parent=11 // pred_check
        %p206 = pneg %p60
      $region14: #{actor_forward.1} parent=11 // pred_check_branch
        %208 = sbr.rel (%p206) target = $region16
      $region15: #{actor_forward.1} parent=11 // pred_region
        _
      $region16: #{actor_forward.1} parent=11 // pred_fallthru
        _
      // Predicated region
      $region17: #{actor_forward.1} parent=11 // pred_check
        %p209 = pneg %p81
      $region18: #{actor_forward.1} parent=11 // pred_check_branch
        %211 = sbr.rel (%p209) target = $region20
      $region19: #{actor_forward.1} parent=11 // pred_region
        _
      $region20: #{actor_forward.1} parent=11 // pred_fallthru
        _
      // Predicated region
      $region21: #{actor_forward.1} parent=11 // pred_check
        %p212 = pneg %p102
      $region22: #{actor_forward.1} parent=11 // pred_check_branch
        %214 = sbr.rel (%p212) target = $region24
      $region23: #{actor_forward.1} parent=11 // pred_region
        _
      $region24: #{actor_forward.1} parent=11 // pred_fallthru
        _
      // Predicated region
      $region25: #{actor_forward.1} parent=11 // pred_check
        %p215 = pneg %p123
      $region26: #{actor_forward.1} parent=11 // pred_check_branch
        %217 = sbr.rel (%p215) target = $region28
      $region27: #{actor_forward.1} parent=11 // pred_region
        _
      $region28: #{actor_forward.1} parent=11 // pred_fallthru
        _
      // Predicated region
      $region29: #{actor_forward.1} parent=11 // pred_check
        %p218 = pneg %p144
      $region30: #{actor_forward.1} parent=11 // pred_check_branch
        %220 = sbr.rel (%p218) target = $region32
      $region31: #{actor_forward.1} parent=11 // pred_region
        _
      $region32: #{actor_forward.1} parent=11 // pred_fallthru
        _
      // Predicated region
      $region33: #{actor_forward.1} parent=11 // pred_check
        %p221 = pneg %p165
      $region34: #{actor_forward.1} parent=11 // pred_check_branch
        %223 = sbr.rel (%p221) target = $region36
      $region35: #{actor_forward.1} parent=11 // pred_region
        _
      $region36: #{actor_forward.1} parent=11 // pred_fallthru
        _
    $region12: #{actor_forward.1} parent=5 // pred_fallthru
      _
    %p224 = scmp.lt.s32.totalorder %s13, 2
    // Predicated region
    $region37: #{actor_forward.1} parent=5 // pred_check
      %p225 = pneg %p224
    $region38: #{actor_forward.1} parent=5 // pred_check_branch
      %227 = sbr.rel (%p225) target = $region40
    $region39: #{actor_forward.1} parent=5 // pred_region
      // Predicated region
      $region41: #{actor_forward.1} parent=39 // pred_check
        %p228 = pneg %p33
      $region42: #{actor_forward.1} parent=39 // pred_check_branch
        %230 = sbr.rel (%p228) target = $region44
      $region43: #{actor_forward.1} parent=39 // pred_region
        %s231 = smul.u32 13, %s13
        %p232 = scmp.lt.s32.totalorder %s231, 25
        %s233 = scalar_select %p232, %s231, 25
        %s234 = smul.addr %s233, 8
        %s235 = scalar_lea.vmem %s0, %s234
        %s236 = smul.u32 13, %s13
      $region44: #{actor_forward.1} parent=39 // pred_fallthru
        _
    $region40: #{actor_forward.1} parent=5 // pred_fallthru
      _
    %p237 = scmp.le.s32.totalorder 1, %s13
    %p238 = scmp.lt.s32.totalorder %s13, 3
    %p239 = pnand %p237, %p238
    %p240 = pneg %p239
    // Predicated region
    $region45: #{actor_forward.1} parent=5 // pred_check
      _
    $region46: #{actor_forward.1} parent=5 // pred_check_branch
      %242 = sbr.rel (%p239) target = $region48
    $region47: #{actor_forward.1} parent=5 // pred_region
      %s243 = ssub.s32 %s13, 1
      %s244 = smul.u32 13, %s18
      %p245 = scmp.lt.s32.totalorder %s244, 25
      %s246 = scalar_select %p245, %s244, 25
      %s247 = smul.addr %s246, 8
      %s248 = scalar_lea.vmem %s0, %s247
      %p249 = pneg %p39
      %p250 = pneg %p36
      %p251 = pneg %p60
      %p252 = pneg %p57
      %p253 = pneg %p81
      %p254 = pneg %p78
      %p255 = pneg %p102
      %p256 = pneg %p99
      %p257 = pneg %p123
      %p258 = pneg %p120
      %p259 = pneg %p144
      %p260 = pneg %p141
      %p261 = pneg %p165
      %p262 = pneg %p162
      %p263 = pneg %p191
      %p264 = pneg %p188
      %s265 = smul.u32 13, %s18
      %p266 = scmp.lt.s32.totalorder %s265, 25
      %s267 = scalar_select %p266, %s265, 25
      %s268 = smul.addr %s267, 8
      %s269 = scalar_lea.vmem %s7, %s268
      %s270 = smul.u32 13, %s18
      %p271 = scmp.lt.s32.totalorder %s270, 25
      %s272 = scalar_select %p271, %s270, 25
      %s273 = smul.addr %s272, 8
      %s274 = scalar_lea.vmem %s0, %s273
      %s275 = smul.u32 13, %s18
      %s276 = smul.u32 13, %s18
      %p277 = scmp.lt.s32.totalorder %s276, 25
      %s278 = scalar_select %p277, %s276, 25
      %s279 = smul.addr %s278, 8
      %s280 = scalar_lea.vmem %s7, %s279
      %s281 = smul.u32 13, %s18
      %v282 = vld [vmem:[%s274] sm:$0xff]
      %v283 = vld [vmem:[%s274 + $0x8] sm:$0xff]
      %v284 = vld [vmem:[%s274 + $0x10] sm:$0xff]
      %v285 = vld [vmem:[%s274 + $0x18] sm:$0xff]
      %v286 = vld [vmem:[%s274 + $0x20] sm:$0xff]
      %v287 = vld [vmem:[%s274 + $0x28] sm:$0xff]
      %v288 = vld [vmem:[%s274 + $0x30] sm:$0xff]
      %v289 = vld [vmem:[%s274 + $0x38] sm:$0xff]
      %v290 = vld [vmem:[%s274 + $0x40] sm:$0xff]
      %v291 = vld [vmem:[%s274 + $0x48] sm:$0xff]
      %v292 = vld [vmem:[%s274 + $0x50] sm:$0xff]
      %v293 = vld [vmem:[%s274 + $0x58] sm:$0xff]
      %v294 = vld [vmem:[%s274 + $0x60] sm:$0xff]
      %v295 = vld [vmem:[%s1] sm:$0xff]
      %v296 = vld [vmem:[%s1 + $0x8] sm:$0xff]
      %v297 = vld [vmem:[%s1 + $0x10] sm:$0xff]
      %v298 = vld [vmem:[%s1 + $0x18] sm:$0xff]
      %v299 = vld [vmem:[%s2] sm:$0x1]
      %v301 = vlaneseq
      %v302 = vshrl.u32 %v301, 7
      %v303 = vsub.s32 0, %v302
      %v304 = vrot.slane %v299, %v303
      %vm306 = vcmask 261120
      %v308 = vsel %vm306, %v282, 0
      %v311 = vsel %vm306, %v283, 0
      %v314 = vsel %vm306, %v284, 0
      %v317 = vsel %vm306, %v285, 0
      %v320 = vsel %vm306, %v286, 0
      %v323 = vsel %vm306, %v287, 0
      %v326 = vsel %vm306, %v288, 0
      %v329 = vsel %vm306, %v289, 0
      %v332 = vsel %vm306, %v290, 0
      %v335 = vsel %vm306, %v291, 0
      %v338 = vsel %vm306, %v292, 0
      %v341 = vsel %vm306, %v293, 0
      %v344 = vsel %vm306, %v294, 0
      %346 = vmatprep.subr.mxu0 0.0
      %347 = vmatpush1.msra.mxu0 %v295
      %348 = vmatprep.subr.mxu0 0.0
      %349 = vmatpush1.msra.mxu0 %v296
      %350 = vmatprep.subr.mxu0 0.0
      %351 = vmatpush1.msra.mxu0 %v297
      %352 = vmatprep.subr.mxu0 0.0
      %353 = vmatpush1.msra.mxu0 %v298
      %354 = vmatprep.subr.mxu0 0.0
      %355 = vmatpush1.msra.mxu0 0.0
      %356 = vmatprep.subr.mxu0 0.0
      %357 = vmatpush1.msra.mxu0 0.0
      %358 = vmatprep.subr.mxu0 0.0
      %359 = vmatpush1.msra.mxu0 0.0
      %360 = vmatprep.subr.mxu0 0.0
      %361 = vmatpush1.msra.mxu0 0.0
      %362 = vmatprep.subr.mxu0 0.0
      %363 = vmatpush1.msra.mxu0 0.0
      %364 = vmatprep.subr.mxu0 0.0
      %365 = vmatpush1.msra.mxu0 0.0
      %366 = vmatprep.subr.mxu0 0.0
      %367 = vmatpush1.msra.mxu0 0.0
      %368 = vmatprep.subr.mxu0 0.0
      %369 = vmatpush1.msra.mxu0 0.0
      %370 = vmatprep.subr.mxu0 0.0
      %371 = vmatpush1.msra.mxu0 0.0
      %372 = vmatprep.subr.mxu0 0.0
      %373 = vmatpush1.msra.mxu0 0.0
      %374 = vmatprep.subr.mxu0 0.0
      %375 = vmatpush1.msra.mxu0 0.0
      %376 = vmatprep.subr.mxu0 0.0
      %377 = vmatpush1.msra.mxu0 0.0
      %378 = vmatprep.subr.mxu0 0.0
      %379 = vmatpush1.msra.mxu0 0.0
      %380 = vmatprep.subr.mxu0 0.0
      %381 = vmatpush1.msra.mxu0 0.0
      %382 = vmatprep.subr.mxu0 0.0
      %383 = vmatpush1.msra.mxu0 0.0
      %384 = vmatprep.subr.mxu0 0.0
      %385 = vmatpush1.msra.mxu0 0.0
      %386 = vmatprep.subr.mxu0 0.0
      %387 = vmatpush1.msra.mxu0 0.0
      %388 = vmatprep.subr.mxu0 0.0
      %389 = vmatpush1.msra.mxu0 0.0
      %390 = vmatprep.subr.mxu0 0.0
      %391 = vmatpush1.msra.mxu0 0.0
      %392 = vmatprep.subr.mxu0 0.0
      %393 = vmatpush1.msra.mxu0 0.0
      %394 = vmatprep.subr.mxu0 0.0
      %395 = vmatpush1.msra.mxu0 0.0
      %396 = vmatprep.subr.mxu0 0.0
      %397 = vmatpush1.msra.mxu0 0.0
      %398 = vmatprep.subr.mxu0 0.0
      %399 = vmatpush1.msra.mxu0 0.0
      %400 = vmatprep.subr.mxu0 0.0
      %401 = vmatpush1.msra.mxu0 0.0
      %402 = vmatprep.subr.mxu0 0.0
      %403 = vmatpush1.msra.mxu0 0.0
      %404 = vmatprep.subr.mxu0 0.0
      %405 = vmatpush1.msra.mxu0 0.0
      %406 = vmatprep.subr.mxu0 0.0
      %407 = vmatpush1.msra.mxu0 0.0
      %408 = vmatprep.subr.mxu0 0.0
      %409 = vmatpush1.msra.mxu0 0.0
      %410 = vmatprep.mubr.f32.mxu0 0.0
      %411 = vmatmul.mubr.f32.gmra.mrb[0].mxu0 %v308
      %v412 = vpop.f32.mrb[0].mxu0
      %v413 = vadd.f32 %v304, %v412
      %v414 = vpop.f32.mrb[0].mxu0
      %415 = vmatprep.mubr.f32.mxu0 0.0
      %416 = vmatmul.mubr.f32.gmra.mrb[0].mxu0 %v311
      %v417 = vpop.f32.mrb[0].mxu0
      %v418 = vadd.f32 %v304, %v417
      %v419 = vpop.f32.mrb[0].mxu0
      %420 = vmatprep.mubr.f32.mxu0 0.0
      %421 = vmatmul.mubr.f32.gmra.mrb[0].mxu0 %v314
      %v422 = vpop.f32.mrb[0].mxu0
      %v423 = vadd.f32 %v304, %v422
      %v424 = vpop.f32.mrb[0].mxu0
      %425 = vmatprep.mubr.f32.mxu0 0.0
      %426 = vmatmul.mubr.f32.gmra.mrb[0].mxu0 %v317
      %v427 = vpop.f32.mrb[0].mxu0
      %v428 = vadd.f32 %v304, %v427
      %v429 = vpop.f32.mrb[0].mxu0
      %430 = vmatprep.mubr.f32.mxu0 0.0
      %431 = vmatmul.mubr.f32.gmra.mrb[0].mxu0 %v320
      %v432 = vpop.f32.mrb[0].mxu0
      %v433 = vadd.f32 %v304, %v432
      %v434 = vpop.f32.mrb[0].mxu0
      %435 = vmatprep.mubr.f32.mxu0 0.0
      %436 = vmatmul.mubr.f32.gmra.mrb[0].mxu0 %v323
      %v437 = vpop.f32.mrb[0].mxu0
      %v438 = vadd.f32 %v304, %v437
      %v439 = vpop.f32.mrb[0].mxu0
      %440 = vmatprep.mubr.f32.mxu0 0.0
      %441 = vmatmul.mubr.f32.gmra.mrb[0].mxu0 %v326
      %v442 = vpop.f32.mrb[0].mxu0
      %v443 = vadd.f32 %v304, %v442
      %v444 = vpop.f32.mrb[0].mxu0
      %445 = vmatprep.mubr.f32.mxu0 0.0
      %446 = vmatmul.mubr.f32.gmra.mrb[0].mxu0 %v329
      %v447 = vpop.f32.mrb[0].mxu0
      %v448 = vadd.f32 %v304, %v447
      %v449 = vpop.f32.mrb[0].mxu0
      %450 = vmatprep.mubr.f32.mxu0 0.0
      %451 = vmatmul.mubr.f32.gmra.mrb[0].mxu0 %v332
      %v452 = vpop.f32.mrb[0].mxu0
      %v453 = vadd.f32 %v304, %v452
      %v454 = vpop.f32.mrb[0].mxu0
      %455 = vmatprep.mubr.f32.mxu0 0.0
      %456 = vmatmul.mubr.f32.gmra.mrb[0].mxu0 %v335
      %v457 = vpop.f32.mrb[0].mxu0
      %v458 = vadd.f32 %v304, %v457
      %v459 = vpop.f32.mrb[0].mxu0
      %460 = vmatprep.mubr.f32.mxu0 0.0
      %461 = vmatmul.mubr.f32.gmra.mrb[0].mxu0 %v338
      %v462 = vpop.f32.mrb[0].mxu0
      %v463 = vadd.f32 %v304, %v462
      %v464 = vpop.f32.mrb[0].mxu0
      %465 = vmatprep.mubr.f32.mxu0 0.0
      %466 = vmatmul.mubr.f32.gmra.mrb[0].mxu0 %v341
      %v467 = vpop.f32.mrb[0].mxu0
      %v468 = vadd.f32 %v304, %v467
      %v469 = vpop.f32.mrb[0].mxu0
      %470 = vmatprep.mubr.f32.mxu0 0.0
      %471 = vmatmul.mubr.f32.gmra.mrb[0].mxu0 %v344
      %v472 = vpop.f32.mrb[0].mxu0
      %v473 = vadd.f32 %v304, %v472
      %v474 = vpop.f32.mrb[0].mxu0
      %475 = vdwg.mxu0
      %v476 = vmax.f32 %v413, 0.0
      %v477 = vmax.f32 %v418, 0.0
      %v478 = vmax.f32 %v423, 0.0
      %v479 = vmax.f32 %v428, 0.0
      %v480 = vmax.f32 %v433, 0.0
      %v481 = vmax.f32 %v438, 0.0
      %v482 = vmax.f32 %v443, 0.0
      %v483 = vmax.f32 %v448, 0.0
      %v484 = vmax.f32 %v453, 0.0
      %v485 = vmax.f32 %v458, 0.0
      %v486 = vmax.f32 %v463, 0.0
      %v487 = vmax.f32 %v468, 0.0
      %v488 = vmax.f32 %v473, 0.0
      %v489 = vld [vmem:[%s3] sm:$0xff]
      %v490 = vld [vmem:[%s3 + $0x8] sm:$0xff]
      %v491 = vld [vmem:[%s3 + $0x10] sm:$0xff]
      %v492 = vld [vmem:[%s3 + $0x18] sm:$0xff]
      %v493 = vld [vmem:[%s3 + $0x20] sm:$0xff]
      %v494 = vld [vmem:[%s3 + $0x28] sm:$0xff]
      %v495 = vld [vmem:[%s3 + $0x30] sm:$0xff]
      %v496 = vld [vmem:[%s3 + $0x38] sm:$0xff]
      %v497 = vld [vmem:[%s4] sm:$0x1]
      %v499 = vlaneseq
      %v500 = vshrl.u32 %v499, 7
      %v501 = vsub.s32 0, %v500
      %v502 = vrot.slane %v497, %v501
      %vm504 = vcmask 523264
      %v506 = vsel %vm504, %v476, 0
      %v509 = vsel %vm504, %v477, 0
      %v512 = vsel %vm504, %v478, 0
      %v515 = vsel %vm504, %v479, 0
      %v518 = vsel %vm504, %v480, 0
      %v521 = vsel %vm504, %v481, 0
      %v524 = vsel %vm504, %v482, 0
      %v527 = vsel %vm504, %v483, 0
      %v530 = vsel %vm504, %v484, 0
      %v533 = vsel %vm504, %v485, 0
      %v536 = vsel %vm504, %v486, 0
      %v539 = vsel %vm504, %v487, 0
      %v542 = vsel %vm504, %v488, 0
      %544 = vmatprep.subr.mxu0 0.0
      %545 = vmatpush1.msra.mxu0 %v489
      %546 = vmatprep.subr.mxu0 0.0
      %547 = vmatpush1.msra.mxu0 %v490
      %548 = vmatprep.subr.mxu0 0.0
      %549 = vmatpush1.msra.mxu0 %v491
      %550 = vmatprep.subr.mxu0 0.0
      %551 = vmatpush1.msra.mxu0 %v492
      %552 = vmatprep.subr.mxu0 0.0
      %553 = vmatpush1.msra.mxu0 %v493
      %554 = vmatprep.subr.mxu0 0.0
      %555 = vmatpush1.msra.mxu0 %v494
      %556 = vmatprep.subr.mxu0 0.0
      %557 = vmatpush1.msra.mxu0 %v495
      %558 = vmatprep.subr.mxu0 0.0
      %559 = vmatpush1.msra.mxu0 %v496
      %560 = vmatprep.subr.mxu0 0.0
      %561 = vmatpush1.msra.mxu0 0.0
      %562 = vmatprep.subr.mxu0 0.0
      %563 = vmatpush1.msra.mxu0 0.0
      %564 = vmatprep.subr.mxu0 0.0
      %565 = vmatpush1.msra.mxu0 0.0
      %566 = vmatprep.subr.mxu0 0.0
      %567 = vmatpush1.msra.mxu0 0.0
      %568 = vmatprep.subr.mxu0 0.0
      %569 = vmatpush1.msra.mxu0 0.0
      %570 = vmatprep.subr.mxu0 0.0
      %571 = vmatpush1.msra.mxu0 0.0
      %572 = vmatprep.subr.mxu0 0.0
      %573 = vmatpush1.msra.mxu0 0.0
      %574 = vmatprep.subr.mxu0 0.0
      %575 = vmatpush1.msra.mxu0 0.0
      %576 = vmatprep.subr.mxu0 0.0
      %577 = vmatpush1.msra.mxu0 0.0
      %578 = vmatprep.subr.mxu0 0.0
      %579 = vmatpush1.msra.mxu0 0.0
      %580 = vmatprep.subr.mxu0 0.0
      %581 = vmatpush1.msra.mxu0 0.0
      %582 = vmatprep.subr.mxu0 0.0
      %583 = vmatpush1.msra.mxu0 0.0
      %584 = vmatprep.subr.mxu0 0.0
      %585 = vmatpush1.msra.mxu0 0.0
      %586 = vmatprep.subr.mxu0 0.0
      %587 = vmatpush1.msra.mxu0 0.0
      %588 = vmatprep.subr.mxu0 0.0
      %589 = vmatpush1.msra.mxu0 0.0
      %590 = vmatprep.subr.mxu0 0.0
      %591 = vmatpush1.msra.mxu0 0.0
      %592 = vmatprep.subr.mxu0 0.0
      %593 = vmatpush1.msra.mxu0 0.0
      %594 = vmatprep.subr.mxu0 0.0
      %595 = vmatpush1.msra.mxu0 0.0
      %596 = vmatprep.subr.mxu0 0.0
      %597 = vmatpush1.msra.mxu0 0.0
      %598 = vmatprep.subr.mxu0 0.0
      %599 = vmatpush1.msra.mxu0 0.0
      %600 = vmatprep.subr.mxu0 0.0
      %601 = vmatpush1.msra.mxu0 0.0
      %602 = vmatprep.subr.mxu0 0.0
      %603 = vmatpush1.msra.mxu0 0.0
      %604 = vmatprep.subr.mxu0 0.0
      %605 = vmatpush1.msra.mxu0 0.0
      %606 = vmatprep.subr.mxu0 0.0
      %607 = vmatpush1.msra.mxu0 0.0
      %608 = vmatprep.mubr.f32.mxu0 0.0
      %609 = vmatmul.mubr.f32.gmra.mrb[0].mxu0 %v506
      %v610 = vpop.f32.mrb[0].mxu0
      %v611 = vadd.f32 %v502, %v610
      %v612 = vpop.f32.mrb[0].mxu0
      %613 = vmatprep.mubr.f32.mxu0 0.0
      %614 = vmatmul.mubr.f32.gmra.mrb[0].mxu0 %v509
      %v615 = vpop.f32.mrb[0].mxu0
      %v616 = vadd.f32 %v502, %v615
      %v617 = vpop.f32.mrb[0].mxu0
      %618 = vmatprep.mubr.f32.mxu0 0.0
      %619 = vmatmul.mubr.f32.gmra.mrb[0].mxu0 %v512
      %v620 = vpop.f32.mrb[0].mxu0
      %v621 = vadd.f32 %v502, %v620
      %v622 = vpop.f32.mrb[0].mxu0
      %623 = vmatprep.mubr.f32.mxu0 0.0
      %624 = vmatmul.mubr.f32.gmra.mrb[0].mxu0 %v515
      %v625 = vpop.f32.mrb[0].mxu0
      %v626 = vadd.f32 %v502, %v625
      %v627 = vpop.f32.mrb[0].mxu0
      %628 = vmatprep.mubr.f32.mxu0 0.0
      %629 = vmatmul.mubr.f32.gmra.mrb[0].mxu0 %v518
      %v630 = vpop.f32.mrb[0].mxu0
      %v631 = vadd.f32 %v502, %v630
      %v632 = vpop.f32.mrb[0].mxu0
      %633 = vmatprep.mubr.f32.mxu0 0.0
      %634 = vmatmul.mubr.f32.gmra.mrb[0].mxu0 %v521
      %v635 = vpop.f32.mrb[0].mxu0
      %v636 = vadd.f32 %v502, %v635
      %v637 = vpop.f32.mrb[0].mxu0
      %638 = vmatprep.mubr.f32.mxu0 0.0
      %639 = vmatmul.mubr.f32.gmra.mrb[0].mxu0 %v524
      %v640 = vpop.f32.mrb[0].mxu0
      %v641 = vadd.f32 %v502, %v640
      %v642 = vpop.f32.mrb[0].mxu0
      %643 = vmatprep.mubr.f32.mxu0 0.0
      %644 = vmatmul.mubr.f32.gmra.mrb[0].mxu0 %v527
      %v645 = vpop.f32.mrb[0].mxu0
      %v646 = vadd.f32 %v502, %v645
      %v647 = vpop.f32.mrb[0].mxu0
      %648 = vmatprep.mubr.f32.mxu0 0.0
      %649 = vmatmul.mubr.f32.gmra.mrb[0].mxu0 %v530
      %v650 = vpop.f32.mrb[0].mxu0
      %v651 = vadd.f32 %v502, %v650
      %v652 = vpop.f32.mrb[0].mxu0
      %653 = vmatprep.mubr.f32.mxu0 0.0
      %654 = vmatmul.mubr.f32.gmra.mrb[0].mxu0 %v533
      %v655 = vpop.f32.mrb[0].mxu0
      %v656 = vadd.f32 %v502, %v655
      %v657 = vpop.f32.mrb[0].mxu0
      %658 = vmatprep.mubr.f32.mxu0 0.0
      %659 = vmatmul.mubr.f32.gmra.mrb[0].mxu0 %v536
      %v660 = vpop.f32.mrb[0].mxu0
      %v661 = vadd.f32 %v502, %v660
      %v662 = vpop.f32.mrb[0].mxu0
      %663 = vmatprep.mubr.f32.mxu0 0.0
      %664 = vmatmul.mubr.f32.gmra.mrb[0].mxu0 %v539
      %v665 = vpop.f32.mrb[0].mxu0
      %v666 = vadd.f32 %v502, %v665
      %v667 = vpop.f32.mrb[0].mxu0
      %668 = vmatprep.mubr.f32.mxu0 0.0
      %669 = vmatmul.mubr.f32.gmra.mrb[0].mxu0 %v542
      %v670 = vpop.f32.mrb[0].mxu0
      %v671 = vadd.f32 %v502, %v670
      %v672 = vpop.f32.mrb[0].mxu0
      %673 = vdwg.mxu0
      %v674 = vmax.f32 %v611, 0.0
      %v675 = vmax.f32 %v616, 0.0
      %v676 = vmax.f32 %v621, 0.0
      %v677 = vmax.f32 %v626, 0.0
      %v678 = vmax.f32 %v631, 0.0
      %v679 = vmax.f32 %v636, 0.0
      %v680 = vmax.f32 %v641, 0.0
      %v681 = vmax.f32 %v646, 0.0
      %v682 = vmax.f32 %v651, 0.0
      %v683 = vmax.f32 %v656, 0.0
      %v684 = vmax.f32 %v661, 0.0
      %v685 = vmax.f32 %v666, 0.0
      %v686 = vmax.f32 %v671, 0.0
      %v687 = vld [vmem:[%s5] sm:$0xff]
      %v688 = vld [vmem:[%s5 + $0x8] sm:$0xff]
      %v689 = vld [vmem:[%s5 + $0x10] sm:$0xff]
      %v690 = vld [vmem:[%s5 + $0x18] sm:$0xff]
      %v691 = vld [vmem:[%s5 + $0x20] sm:$0xff]
      %v692 = vld [vmem:[%s5 + $0x28] sm:$0xff]
      %v693 = vld [vmem:[%s5 + $0x30] sm:$0xff]
      %v694 = vld [vmem:[%s5 + $0x38] sm:$0xff]
      %v695 = vld [vmem:[%s6] sm:$0x1]
      %v697 = vlaneseq
      %v698 = vshrl.u32 %v697, 7
      %v699 = vsub.s32 0, %v698
      %v700 = vrot.slane %v695, %v699
      %v703 = vsel %vm504, %v674, 0
      %v706 = vsel %vm504, %v675, 0
      %v709 = vsel %vm504, %v676, 0
      %v712 = vsel %vm504, %v677, 0
      %v715 = vsel %vm504, %v678, 0
      %v718 = vsel %vm504, %v679, 0
      %v721 = vsel %vm504, %v680, 0
      %v724 = vsel %vm504, %v681, 0
      %v727 = vsel %vm504, %v682, 0
      %v730 = vsel %vm504, %v683, 0
      %v733 = vsel %vm504, %v684, 0
      %v736 = vsel %vm504, %v685, 0
      %v739 = vsel %vm504, %v686, 0
      %741 = vmatprep.subr.mxu0 0.0
      %742 = vmatpush1.msra.mxu0 %v687
      %743 = vmatprep.subr.mxu0 0.0
      %744 = vmatpush1.msra.mxu0 %v688
      %745 = vmatprep.subr.mxu0 0.0
      %746 = vmatpush1.msra.mxu0 %v689
      %747 = vmatprep.subr.mxu0 0.0
      %748 = vmatpush1.msra.mxu0 %v690
      %749 = vmatprep.subr.mxu0 0.0
      %750 = vmatpush1.msra.mxu0 %v691
      %751 = vmatprep.subr.mxu0 0.0
      %752 = vmatpush1.msra.mxu0 %v692
      %753 = vmatprep.subr.mxu0 0.0
      %754 = vmatpush1.msra.mxu0 %v693
      %755 = vmatprep.subr.mxu0 0.0
      %756 = vmatpush1.msra.mxu0 %v694
      %757 = vmatprep.subr.mxu0 0.0
      %758 = vmatpush1.msra.mxu0 0.0
      %759 = vmatprep.subr.mxu0 0.0
      %760 = vmatpush1.msra.mxu0 0.0
      %761 = vmatprep.subr.mxu0 0.0
      %762 = vmatpush1.msra.mxu0 0.0
      %763 = vmatprep.subr.mxu0 0.0
      %764 = vmatpush1.msra.mxu0 0.0
      %765 = vmatprep.subr.mxu0 0.0
      %766 = vmatpush1.msra.mxu0 0.0
      %767 = vmatprep.subr.mxu0 0.0
      %768 = vmatpush1.msra.mxu0 0.0
      %769 = vmatprep.subr.mxu0 0.0
      %770 = vmatpush1.msra.mxu0 0.0
      %771 = vmatprep.subr.mxu0 0.0
      %772 = vmatpush1.msra.mxu0 0.0
      %773 = vmatprep.subr.mxu0 0.0
      %774 = vmatpush1.msra.mxu0 0.0
      %775 = vmatprep.subr.mxu0 0.0
      %776 = vmatpush1.msra.mxu0 0.0
      %777 = vmatprep.subr.mxu0 0.0
      %778 = vmatpush1.msra.mxu0 0.0
      %779 = vmatprep.subr.mxu0 0.0
      %780 = vmatpush1.msra.mxu0 0.0
      %781 = vmatprep.subr.mxu0 0.0
      %782 = vmatpush1.msra.mxu0 0.0
      %783 = vmatprep.subr.mxu0 0.0
      %784 = vmatpush1.msra.mxu0 0.0
      %785 = vmatprep.subr.mxu0 0.0
      %786 = vmatpush1.msra.mxu0 0.0
      %787 = vmatprep.subr.mxu0 0.0
      %788 = vmatpush1.msra.mxu0 0.0
      %789 = vmatprep.subr.mxu0 0.0
      %790 = vmatpush1.msra.mxu0 0.0
      %791 = vmatprep.subr.mxu0 0.0
      %792 = vmatpush1.msra.mxu0 0.0
      %793 = vmatprep.subr.mxu0 0.0
      %794 = vmatpush1.msra.mxu0 0.0
      %795 = vmatprep.subr.mxu0 0.0
      %796 = vmatpush1.msra.mxu0 0.0
      %797 = vmatprep.subr.mxu0 0.0
      %798 = vmatpush1.msra.mxu0 0.0
      %799 = vmatprep.subr.mxu0 0.0
      %800 = vmatpush1.msra.mxu0 0.0
      %801 = vmatprep.subr.mxu0 0.0
      %802 = vmatpush1.msra.mxu0 0.0
      %803 = vmatprep.subr.mxu0 0.0
      %804 = vmatpush1.msra.mxu0 0.0
      %805 = vmatprep.mubr.f32.mxu0 0.0
      %806 = vmatmul.mubr.f32.gmra.mrb[0].mxu0 %v703
      %v807 = vpop.f32.mrb[0].mxu0
      %v808 = vadd.f32 %v700, %v807
      %v809 = vpop.f32.mrb[0].mxu0
      %810 = vmatprep.mubr.f32.mxu0 0.0
      %811 = vmatmul.mubr.f32.gmra.mrb[0].mxu0 %v706
      %v812 = vpop.f32.mrb[0].mxu0
      %v813 = vadd.f32 %v700, %v812
      %v814 = vpop.f32.mrb[0].mxu0
      %815 = vmatprep.mubr.f32.mxu0 0.0
      %816 = vmatmul.mubr.f32.gmra.mrb[0].mxu0 %v709
      %v817 = vpop.f32.mrb[0].mxu0
      %v818 = vadd.f32 %v700, %v817
      %v819 = vpop.f32.mrb[0].mxu0
      %820 = vmatprep.mubr.f32.mxu0 0.0
      %821 = vmatmul.mubr.f32.gmra.mrb[0].mxu0 %v712
      %v822 = vpop.f32.mrb[0].mxu0
      %v823 = vadd.f32 %v700, %v822
      %v824 = vpop.f32.mrb[0].mxu0
      %825 = vmatprep.mubr.f32.mxu0 0.0
      %826 = vmatmul.mubr.f32.gmra.mrb[0].mxu0 %v715
      %v827 = vpop.f32.mrb[0].mxu0
      %v828 = vadd.f32 %v700, %v827
      %v829 = vpop.f32.mrb[0].mxu0
      %830 = vmatprep.mubr.f32.mxu0 0.0
      %831 = vmatmul.mubr.f32.gmra.mrb[0].mxu0 %v718
      %v832 = vpop.f32.mrb[0].mxu0
      %v833 = vadd.f32 %v700, %v832
      %v834 = vpop.f32.mrb[0].mxu0
      %835 = vmatprep.mubr.f32.mxu0 0.0
      %836 = vmatmul.mubr.f32.gmra.mrb[0].mxu0 %v721
      %v837 = vpop.f32.mrb[0].mxu0
      %v838 = vadd.f32 %v700, %v837
      %v839 = vpop.f32.mrb[0].mxu0
      %840 = vmatprep.mubr.f32.mxu0 0.0
      %841 = vmatmul.mubr.f32.gmra.mrb[0].mxu0 %v724
      %v842 = vpop.f32.mrb[0].mxu0
      %v843 = vadd.f32 %v700, %v842
      %v844 = vpop.f32.mrb[0].mxu0
      %845 = vmatprep.mubr.f32.mxu0 0.0
      %846 = vmatmul.mubr.f32.gmra.mrb[0].mxu0 %v727
      %v847 = vpop.f32.mrb[0].mxu0
      %v848 = vadd.f32 %v700, %v847
      %v849 = vpop.f32.mrb[0].mxu0
      %850 = vmatprep.mubr.f32.mxu0 0.0
      %851 = vmatmul.mubr.f32.gmra.mrb[0].mxu0 %v730
      %v852 = vpop.f32.mrb[0].mxu0
      %v853 = vadd.f32 %v700, %v852
      %v854 = vpop.f32.mrb[0].mxu0
      %855 = vmatprep.mubr.f32.mxu0 0.0
      %856 = vmatmul.mubr.f32.gmra.mrb[0].mxu0 %v733
      %v857 = vpop.f32.mrb[0].mxu0
      %v858 = vadd.f32 %v700, %v857
      %v859 = vpop.f32.mrb[0].mxu0
      %860 = vmatprep.mubr.f32.mxu0 0.0
      %861 = vmatmul.mubr.f32.gmra.mrb[0].mxu0 %v736
      %v862 = vpop.f32.mrb[0].mxu0
      %v863 = vadd.f32 %v700, %v862
      %v864 = vpop.f32.mrb[0].mxu0
      %865 = vmatprep.mubr.f32.mxu0 0.0
      %866 = vmatmul.mubr.f32.gmra.mrb[0].mxu0 %v739
      %v867 = vpop.f32.mrb[0].mxu0
      %v868 = vadd.f32 %v700, %v867
      %v869 = vpop.f32.mrb[0].mxu0
      %870 = vdwg.mxu0
      %vm871 = vcmask 64512
      %v872 = vsel %vm871, %v808, -inf
      %873 = vmax.xlane.f32.xlu0 %v872
      %v874 = vpop.xlane.xlu0 %873
      %v875 = vsel %vm871, %v813, -inf
      %876 = vmax.xlane.f32.xlu0 %v875
      %v877 = vpop.xlane.xlu0 %876
      %v878 = vsel %vm871, %v818, -inf
      %879 = vmax.xlane.f32.xlu0 %v878
      %v880 = vpop.xlane.xlu0 %879
      %v881 = vsel %vm871, %v823, -inf
      %882 = vmax.xlane.f32.xlu0 %v881
      %v883 = vpop.xlane.xlu0 %882
      %v884 = vsel %vm871, %v828, -inf
      %885 = vmax.xlane.f32.xlu0 %v884
      %v886 = vpop.xlane.xlu0 %885
      %v887 = vsel %vm871, %v833, -inf
      %888 = vmax.xlane.f32.xlu0 %v887
      %v889 = vpop.xlane.xlu0 %888
      %v890 = vsel %vm871, %v838, -inf
      %891 = vmax.xlane.f32.xlu0 %v890
      %v892 = vpop.xlane.xlu0 %891
      %v893 = vsel %vm871, %v843, -inf
      %894 = vmax.xlane.f32.xlu0 %v893
      %v895 = vpop.xlane.xlu0 %894
      %v896 = vsel %vm871, %v848, -inf
      %897 = vmax.xlane.f32.xlu0 %v896
      %v898 = vpop.xlane.xlu0 %897
      %v899 = vsel %vm871, %v853, -inf
      %900 = vmax.xlane.f32.xlu0 %v899
      %v901 = vpop.xlane.xlu0 %900
      %v902 = vsel %vm871, %v858, -inf
      %903 = vmax.xlane.f32.xlu0 %v902
      %v904 = vpop.xlane.xlu0 %903
      %v905 = vsel %vm871, %v863, -inf
      %906 = vmax.xlane.f32.xlu0 %v905
      %v907 = vpop.xlane.xlu0 %906
      %v908 = vsel %vm871, %v868, -inf
      %909 = vmax.xlane.f32.xlu0 %v908
      %v910 = vpop.xlane.xlu0 %909
      %v911 = vsub.f32 %v808, %v874
      %v912 = vsub.f32 %v813, %v877
      %v913 = vsub.f32 %v818, %v880
      %v914 = vsub.f32 %v823, %v883
      %v915 = vsub.f32 %v828, %v886
      %v916 = vsub.f32 %v833, %v889
      %v917 = vsub.f32 %v838, %v892
      %v918 = vsub.f32 %v843, %v895
      %v919 = vsub.f32 %v848, %v898
      %v920 = vsub.f32 %v853, %v901
      %v921 = vsub.f32 %v858, %v904
      %v922 = vsub.f32 %v863, %v907
      %v923 = vsub.f32 %v868, %v910
      %v924 = vmul.f32 %v911, 1.442695
      %v925 = vpow.pop %v924
      %v926 = vmul.f32 %v912, 1.442695
      %v927 = vpow.pop %v926
      %v928 = vmul.f32 %v913, 1.442695
      %v929 = vpow.pop %v928
      %v930 = vmul.f32 %v914, 1.442695
      %v931 = vpow.pop %v930
      %v932 = vmul.f32 %v915, 1.442695
      %v933 = vpow.pop %v932
      %v934 = vmul.f32 %v916, 1.442695
      %v935 = vpow.pop %v934
      %v936 = vmul.f32 %v917, 1.442695
      %v937 = vpow.pop %v936
      %v938 = vmul.f32 %v918, 1.442695
      %v939 = vpow.pop %v938
      %v940 = vmul.f32 %v919, 1.442695
      %v941 = vpow.pop %v940
      %v942 = vmul.f32 %v920, 1.442695
      %v943 = vpow.pop %v942
      %v944 = vmul.f32 %v921, 1.442695
      %v945 = vpow.pop %v944
      %v946 = vmul.f32 %v922, 1.442695
      %v947 = vpow.pop %v946
      %v948 = vmul.f32 %v923, 1.442695
      %v949 = vpow.pop %v948
      %v950 = vsel %vm871, %v925, 0.0
      %951 = vadd.xlane.f32.xlu0 %v950
      %v952 = vpop.xlane.xlu0 %951
      %v953 = vsel %vm871, %v927, 0.0
      %954 = vadd.xlane.f32.xlu0 %v953
      %v955 = vpop.xlane.xlu0 %954
      %v956 = vsel %vm871, %v929, 0.0
      %957 = vadd.xlane.f32.xlu0 %v956
      %v958 = vpop.xlane.xlu0 %957
      %v959 = vsel %vm871, %v931, 0.0
      %960 = vadd.xlane.f32.xlu0 %v959
      %v961 = vpop.xlane.xlu0 %960
      %v962 = vsel %vm871, %v933, 0.0
      %963 = vadd.xlane.f32.xlu0 %v962
      %v964 = vpop.xlane.xlu0 %963
      %v965 = vsel %vm871, %v935, 0.0
      %966 = vadd.xlane.f32.xlu0 %v965
      %v967 = vpop.xlane.xlu0 %966
      %v968 = vsel %vm871, %v937, 0.0
      %969 = vadd.xlane.f32.xlu0 %v968
      %v970 = vpop.xlane.xlu0 %969
      %v971 = vsel %vm871, %v939, 0.0
      %972 = vadd.xlane.f32.xlu0 %v971
      %v973 = vpop.xlane.xlu0 %972
      %v974 = vsel %vm871, %v941, 0.0
      %975 = vadd.xlane.f32.xlu0 %v974
      %v976 = vpop.xlane.xlu0 %975
      %v977 = vsel %vm871, %v943, 0.0
      %978 = vadd.xlane.f32.xlu0 %v977
      %v979 = vpop.xlane.xlu0 %978
      %v980 = vsel %vm871, %v945, 0.0
      %981 = vadd.xlane.f32.xlu0 %v980
      %v982 = vpop.xlane.xlu0 %981
      %v983 = vsel %vm871, %v947, 0.0
      %984 = vadd.xlane.f32.xlu0 %v983
      %v985 = vpop.xlane.xlu0 %984
      %v986 = vsel %vm871, %v949, 0.0
      %987 = vadd.xlane.f32.xlu0 %v986
      %v988 = vpop.xlane.xlu0 %987
      %v989 = vrcp.pop %v952
      %v990 = vmul.f32 %v925, %v989
      %v991 = vrcp.pop %v955
      %v992 = vmul.f32 %v927, %v991
      %v993 = vrcp.pop %v958
      %v994 = vmul.f32 %v929, %v993
      %v995 = vrcp.pop %v961
      %v996 = vmul.f32 %v931, %v995
      %v997 = vrcp.pop %v964
      %v998 = vmul.f32 %v933, %v997
      %v999 = vrcp.pop %v967
      %v1000 = vmul.f32 %v935, %v999
      %v1001 = vrcp.pop %v970
      %v1002 = vmul.f32 %v937, %v1001
      %v1003 = vrcp.pop %v973
      %v1004 = vmul.f32 %v939, %v1003
      %v1005 = vrcp.pop %v976
      %v1006 = vmul.f32 %v941, %v1005
      %v1007 = vrcp.pop %v979
      %v1008 = vmul.f32 %v943, %v1007
      %v1009 = vrcp.pop %v982
      %v1010 = vmul.f32 %v945, %v1009
      %v1011 = vrcp.pop %v985
      %v1012 = vmul.f32 %v947, %v1011
      %v1013 = vrcp.pop %v988
      %v1014 = vmul.f32 %v949, %v1013
      %1015 = vst.msk [vmem:[%s280] sm:$0xff] %vm871, %v990
      %1016 = vst.msk [vmem:[%s280 + $0x8] sm:$0xff] %vm871, %v992
      %1017 = vst.msk [vmem:[%s280 + $0x10] sm:$0xff] %vm871, %v994
      %1018 = vst.msk [vmem:[%s280 + $0x18] sm:$0xff] %vm871, %v996
      %1019 = vst.msk [vmem:[%s280 + $0x20] sm:$0xff] %vm871, %v998
      %1020 = vst.msk [vmem:[%s280 + $0x28] sm:$0xff] %vm871, %v1000
      %1021 = vst.msk [vmem:[%s280 + $0x30] sm:$0xff] %vm871, %v1002
      %1022 = vst.msk [vmem:[%s280 + $0x38] sm:$0xff] %vm871, %v1004
      %1023 = vst.msk [vmem:[%s280 + $0x40] sm:$0xff] %vm871, %v1006
      %1024 = vst.msk [vmem:[%s280 + $0x48] sm:$0xff] %vm871, %v1008
      %1025 = vst.msk [vmem:[%s280 + $0x50] sm:$0xff] %vm871, %v1010
      %1026 = vst.msk [vmem:[%s280 + $0x58] sm:$0xff] %vm871, %v1012
      %1027 = vst.msk [vmem:[%s280 + $0x60] sm:$0xff] %vm871, %v1014
      %s1028 = smul.u32 13, %s18
      %p1029 = scmp.lt.s32.totalorder %s1028, 25
      %s1030 = scalar_select %p1029, %s1028, 25
      %s1031 = smul.addr %s1030, 8
      %s1032 = scalar_lea.vmem %s7, %s1031
      // Predicated region
      $region49: #{actor_forward.1} parent=47 // pred_check
        %p1033 = pneg %p188
      $region50: #{actor_forward.1} parent=47 // pred_check_branch
        %1035 = sbr.rel (%p1033) target = $region52
      $region51: #{actor_forward.1} parent=47 // pred_region
        %s1036 = smul.u32 13, %s18
      $region52: #{actor_forward.1} parent=47 // pred_fallthru
        _
    $region48: #{actor_forward.1} parent=5 // pred_fallthru
      _
    %p1037 = scmp.le.s32.totalorder 2, %s13
    // Predicated region
    $region53: #{actor_forward.1} parent=5 // pred_check
      %p1038 = pneg %p1037
    $region54: #{actor_forward.1} parent=5 // pred_check_branch
      %1040 = sbr.rel (%p1038) target = $region56
    $region55: #{actor_forward.1} parent=5 // pred_region
      %s1041 = ssub.s32 %s13, 2
      // Predicated region
      $region57: #{actor_forward.1} parent=55 // pred_check
        %p1042 = pneg %p194
      $region58: #{actor_forward.1} parent=55 // pred_check_branch
        %1044 = sbr.rel (%p1042) target = $region60
      $region59: #{actor_forward.1} parent=55 // pred_region
        %s1045 = smul.u32 13, %s19
        %p1046 = scmp.lt.s32.totalorder %s1045, 25
        %s1047 = scalar_select %p1046, %s1045, 25
        %s1048 = smul.addr %s1047, 8
        %s1049 = scalar_lea.vmem %s7, %s1048
      $region60: #{actor_forward.1} parent=55 // pred_fallthru
        _
    $region56: #{actor_forward.1} parent=5 // pred_fallthru
      _
  $region6: #{actor_forward.1} parent=0 // loop_footer
    %s17 = sadd.s32 1, %s13
  $region7: #{actor_forward.1} parent=0 // loop_footer_branch
    %12 = sbr.rel target = $region3
  $region8: #{actor_forward.1} parent=0 // loop_exit
    _

</llo_original>
